<compile_context>
chip_gen: v5e
topology: v5e:2x2
jax: 0.10.0
libtpu: 0.0.40
codegen_flags: <defaults>
</compile_context>

<pallas_src>
import functools

import jax
import jax.numpy as jnp
from jax.experimental import pallas as pl
from jax.experimental.pallas import tpu as pltpu

LN_EPS = 1e-5  # PyTorch nn.LayerNorm default


def _round_up(x, m):
    return ((x + m - 1) // m) * m


def _ln_linear_kernel(x_ref, w_ref, s_ref, b_ref, o_ref, *, pack, c, hp):
    """Fused LayerNorm (affine + centering folded) + Linear for one row-tile.

    `pack` logical rows are packed along lanes of each stored row.
      x_ref: (tmp, pack*c)       packed input rows (native dtype)
      w_ref: (pack*c, pack*hp)   block-diagonal folded weight (gamma * W^T)
      s_ref: (1, hp)             column sums of the folded weight (f32)
      b_ref: (1, pack*hp)        folded bias, tiled `pack` times (f32)
      o_ref: (tmp, pack*hp)      packed output rows (lane-dense, pack*hp % 128 == 0)
    """
    x32 = x_ref[...].astype(jnp.float32)
    # MXU consumes x in the matmul dtype directly (no normalized tile materialized).
    raw = jnp.dot(x_ref[...].astype(w_ref.dtype), w_ref[...],
                  preferred_element_type=jnp.float32)        # (tmp, pack*hp)
    s = s_ref[...]                                            # (1, hp)

    pieces = []
    for j in range(pack):
        xj = x32[:, j * c:(j + 1) * c]                        # (tmp, c)
        mean_j = jnp.mean(xj, axis=-1, keepdims=True)         # (tmp, 1)
        var_j = jnp.maximum(
            jnp.mean(xj * xj, axis=-1, keepdims=True) - mean_j * mean_j, 0.0)
        inv_j = jax.lax.rsqrt(var_j + LN_EPS)                 # (tmp, 1)
        raw_j = raw[:, j * hp:(j + 1) * hp]                   # (tmp, hp)
        # LN(x) @ W'^fold == inv * (x @ W' - mean * colsum(W'))
        pieces.append(inv_j * (raw_j - mean_j * s))
    y = pieces[0] if pack == 1 else jnp.concatenate(pieces, axis=-1)
    o_ref[...] = (y + b_ref[...]).astype(o_ref.dtype)


def simple_feature_single_model(features, ln_gamma, ln_beta, lin_w, lin_b,
                                *, row_tile=2048):
    """features: (B, S, C); lin_w: (H, C) PyTorch-style; returns (B, S, H)."""
    B, S, C = features.shape
    H = lin_w.shape[0]
    M = B * S
    out_dtype = features.dtype

    # ---- One-time exact parameter transform: fold LN affine into the Linear ----
    gamma = ln_gamma.astype(jnp.float32)
    beta = ln_beta.astype(jnp.float32)
    w_t = lin_w.astype(jnp.float32).T                       # (C, H)
    w_fold = gamma[:, None] * w_t                           # (C, H)
    bias_fold = beta @ w_t + lin_b.astype(jnp.float32)      # (H,)

    # Native bf16 MXU path when the activations are bf16; otherwise keep f32.
    mm_dtype = jnp.bfloat16 if features.dtype == jnp.bfloat16 else jnp.float32

    # ---- Lane-dense output via row packing (no H padding when 128 % H == 0) ----
    if H % 128 == 0:
        pack, Hp = 1, H
    elif 128 % H == 0:
        pack, Hp = 128 // H, H
    else:
        pack, Hp = 1, _round_up(H, 128)   # fallback: zero-pad H + post-slice

    if Hp != H:
        w_fold = jnp.pad(w_fold, ((0, 0), (0, Hp - H)))
        bias_fold = jnp.pad(bias_fold, (0, Hp - H))

    w_cast = w_fold.astype(mm_dtype)
    # Column sums of the weight actually used by the matmul (for the centering fold).
    s_fold = jnp.sum(w_cast.astype(jnp.float32), axis=0).reshape(1, Hp)
    # Block-diagonal weight: packed row j uses diagonal block j.
    w_bd = jnp.kron(jnp.eye(pack, dtype=w_cast.dtype), w_cast) if pack > 1 else w_cast
    bias_p = jnp.tile(bias_fold, pack).reshape(1, pack * Hp)

    # ---- Pack `pack` logical rows per stored row (free reshape when M % pack == 0) --
    Mp = _round_up(M, pack)
    x2d = features.reshape(M, C)
    if Mp != M:                                    # rare edge case (tiny pad)
        x2d = jnp.pad(x2d, ((0, Mp - M), (0, 0)))
    rows = Mp // pack
    xp = x2d.reshape(rows, pack * C)               # free row-major reshape

    # ---- Row-tile selection (in packed rows) ----
    align = 8 if features.dtype == jnp.float32 else 16
    if rows <= align:
        tmp = rows                                 # single full-extent block
    else:
        tmp = min(_round_up(max(row_tile // pack, align), align),
                  _round_up(rows, align))
        if tmp >= rows:
            # Keep >= 2 grid steps so both v7x TensorCores (megacore) get work.
            tmp = _round_up(pl.cdiv(rows, 2), align)
    grid = (pl.cdiv(rows, tmp),)                   # partial trailing block is fine

    kernel = functools.partial(_ln_linear_kernel, pack=pack, c=C, hp=Hp)

    x_bytes = jnp.dtype(features.dtype).itemsize
    o_bytes = jnp.dtype(out_dtype).itemsize
    w_bytes = jnp.dtype(mm_dtype).itemsize
    cost = pl.CostEstimate(
        flops=2 * rows * (pack * C) * (pack * Hp),
        transcendentals=Mp,
        bytes_accessed=(Mp * C * x_bytes + Mp * Hp * o_bytes
                        + (pack * C) * (pack * Hp) * w_bytes + 8 * Hp * (pack + 1)),
    )

    out = pl.pallas_call(
        kernel,
        out_shape=jax.ShapeDtypeStruct((rows, pack * Hp), out_dtype),
        grid_spec=pltpu.PrefetchScalarGridSpec(
            num_scalar_prefetch=0,
            grid=grid,
            in_specs=[
                pl.BlockSpec((tmp, pack * C), lambda i: (i, 0)),        # packed rows
                pl.BlockSpec((pack * C, pack * Hp), lambda i: (0, 0)),  # folded W (resident)
                pl.BlockSpec((1, Hp), lambda i: (0, 0)),                # colsum(W') (resident)
                pl.BlockSpec((1, pack * Hp), lambda i: (0, 0)),         # folded bias (resident)
            ],
            out_specs=pl.BlockSpec((tmp, pack * Hp), lambda i: (i, 0)),
        ),
        compiler_params=pltpu.CompilerParams(
            dimension_semantics=("parallel",)),
        cost_estimate=cost,
    )(xp, w_bd, s_fold, bias_p)

    out = out.reshape(Mp, Hp)                      # free un-packing reshape
    if Mp != M:
        out = out[:M]
    if Hp != H:
        out = out[:, :H]
    return out.reshape(B, S, H)


def _reference(features, ln_gamma, ln_beta, lin_w, lin_b):
    x = features.astype(jnp.float32)
    mean = jnp.mean(x, axis=-1, keepdims=True)
    var = jnp.mean((x - mean) ** 2, axis=-1, keepdims=True)
    xn = (x - mean) * jax.lax.rsqrt(var + LN_EPS)
    xn = xn * ln_gamma.astype(jnp.float32) + ln_beta.astype(jnp.float32)
    return xn @ lin_w.astype(jnp.float32).T + lin_b.astype(jnp.float32)


if __name__ == "__main__":
    # Small shapes consistent with the module:
    #   num_clip_layers = C = 32 (LayerNorm dim), final_linear: Linear(C -> H=64)
    B, S, C, H = 2, 8, 32, 64

    key = jax.random.PRNGKey(0)
    k_x, k_g, k_b, k_w, k_lb = jax.random.split(key, 5)

    features = jax.random.normal(k_x, (B, S, C), dtype=jnp.float32)

    # Deterministic synthetic parameters (no checkpoint load).
    ln_gamma = 1.0 + 0.01 * jax.random.normal(k_g, (C,), dtype=jnp.float32)
    ln_beta = 0.01 * jax.random.normal(k_b, (C,), dtype=jnp.float32)
    lin_w = jax.random.normal(k_w, (H, C), dtype=jnp.float32) * (1.0 / jnp.sqrt(C))
    lin_b = 0.01 * jax.random.normal(k_lb, (H,), dtype=jnp.float32)

    out = simple_feature_single_model(features, ln_gamma, ln_beta, lin_w, lin_b)
    out = jax.block_until_ready(out)

    ref = _reference(features, ln_gamma, ln_beta, lin_w, lin_b)
    assert out.shape == (B, S, H)
    assert jnp.allclose(out, ref, atol=1e-3, rtol=1e-3), "mismatch vs reference"

    print("KERNEL_OK")
</pallas_src>

<mosaic_0001>
module attributes {stable_mosaic.version = 11 : i64} {
  func.func @_ln_linear_kernel(%arg0: i32, %arg1: memref<8x64xf32, #tpu.memory_space<vmem>>, %arg2: memref<64x128xf32, #tpu.memory_space<vmem>>, %arg3: memref<1x64xf32, #tpu.memory_space<vmem>>, %arg4: memref<1x128xf32, #tpu.memory_space<vmem>>, %arg5: memref<8x128xf32, #tpu.memory_space<vmem>>) attributes {dimension_semantics = [#tpu.dimension_semantics<parallel>], iteration_bounds = array<i64: 1>, scalar_prefetch = 0 : i64, scratch_operands = 0 : i64, tpu.core_type = #tpu.core_type<tc>, window_params = [{transform_indices = @transform_0, window_bounds = array<i64: 8, 64>}, {pipeline_mode = #tpu.pipeline_mode<synchronous>, transform_indices = @transform_1, window_bounds = array<i64: 64, 128>}, {pipeline_mode = #tpu.pipeline_mode<synchronous>, transform_indices = @transform_2, window_bounds = array<i64: 1, 64>}, {pipeline_mode = #tpu.pipeline_mode<synchronous>, transform_indices = @transform_3, window_bounds = array<i64: 1, 128>}, {transform_indices = @transform_4, window_bounds = array<i64: 8, 128>}]} {
    %c0 = arith.constant 0 : index
    %c0_0 = arith.constant 0 : index
    %0 = vector.load %arg1[%c0, %c0_0] : memref<8x64xf32, #tpu.memory_space<vmem>>, vector<8x64xf32>
    %c0_1 = arith.constant 0 : index
    %c0_2 = arith.constant 0 : index
    %1 = vector.load %arg1[%c0_1, %c0_2] : memref<8x64xf32, #tpu.memory_space<vmem>>, vector<8x64xf32>
    %c0_3 = arith.constant 0 : index
    %c0_4 = arith.constant 0 : index
    %2 = vector.load %arg2[%c0_3, %c0_4] : memref<64x128xf32, #tpu.memory_space<vmem>>, vector<64x128xf32>
    %cst = arith.constant dense<0.000000e+00> : vector<8x128xf32>
    %3 = tpu.matmul %1, %2, %cst {dimension_numbers = #tpu.dot_dimension_numbers<[1], [0], [0], [1], [0, 0, 1, 1], [], []>} : vector<8x64xf32>, vector<64x128xf32>, vector<8x128xf32> -> vector<8x128xf32>
    %c0_5 = arith.constant 0 : index
    %c0_6 = arith.constant 0 : index
    %4 = vector.load %arg3[%c0_5, %c0_6] : memref<1x64xf32, #tpu.memory_space<vmem>>, vector<1x64xf32>
    %5 = vector.extract_strided_slice %0 {offsets = [0, 0], sizes = [8, 32], strides = [1, 1]} : vector<8x64xf32> to vector<8x32xf32>
    %cst_7 = arith.constant dense<0.000000e+00> : vector<8xf32>
    %6 = vector.multi_reduction <add>, %5, %cst_7 [1] : vector<8x32xf32> to vector<8xf32>
    %7 = vector.shape_cast %6 : vector<8xf32> to vector<8x1xf32>
    %cst_8 = arith.constant 3.200000e+01 : f32
    %8 = vector.broadcast %cst_8 : f32 to vector<8x1xf32>
    %9 = arith.divf %7, %8 : vector<8x1xf32>
    %10 = arith.mulf %5, %5 : vector<8x32xf32>
    %cst_9 = arith.constant dense<0.000000e+00> : vector<8xf32>
    %11 = vector.multi_reduction <add>, %10, %cst_9 [1] : vector<8x32xf32> to vector<8xf32>
    %12 = vector.shape_cast %11 : vector<8xf32> to vector<8x1xf32>
    %cst_10 = arith.constant 3.200000e+01 : f32
    %13 = vector.broadcast %cst_10 : f32 to vector<8x1xf32>
    %14 = arith.divf %12, %13 : vector<8x1xf32>
    %15 = arith.mulf %9, %9 : vector<8x1xf32>
    %16 = arith.subf %14, %15 : vector<8x1xf32>
    %cst_11 = arith.constant 0.000000e+00 : f32
    %17 = vector.broadcast %cst_11 : f32 to vector<8x1xf32>
    %18 = arith.maximumf %16, %17 : vector<8x1xf32>
    %cst_12 = arith.constant 9.99999974E-6 : f32
    %19 = vector.broadcast %cst_12 : f32 to vector<8x1xf32>
    %20 = arith.addf %18, %19 : vector<8x1xf32>
    %21 = math.rsqrt %20 : vector<8x1xf32>
    %22 = vector.extract_strided_slice %3 {offsets = [0, 0], sizes = [8, 64], strides = [1, 1]} : vector<8x128xf32> to vector<8x64xf32>
    %23 = vector.broadcast %9 : vector<8x1xf32> to vector<8x64xf32>
    %24 = vector.broadcast %4 : vector<1x64xf32> to vector<8x64xf32>
    %25 = arith.mulf %23, %24 : vector<8x64xf32>
    %26 = arith.subf %22, %25 : vector<8x64xf32>
    %27 = vector.broadcast %21 : vector<8x1xf32> to vector<8x64xf32>
    %28 = arith.mulf %27, %26 : vector<8x64xf32>
    %29 = vector.extract_strided_slice %0 {offsets = [0, 32], sizes = [8, 32], strides = [1, 1]} : vector<8x64xf32> to vector<8x32xf32>
    %cst_13 = arith.constant dense<0.000000e+00> : vector<8xf32>
    %30 = vector.multi_reduction <add>, %29, %cst_13 [1] : vector<8x32xf32> to vector<8xf32>
    %31 = vector.shape_cast %30 : vector<8xf32> to vector<8x1xf32>
    %cst_14 = arith.constant 3.200000e+01 : f32
    %32 = vector.broadcast %cst_14 : f32 to vector<8x1xf32>
    %33 = arith.divf %31, %32 : vector<8x1xf32>
    %34 = arith.mulf %29, %29 : vector<8x32xf32>
    %cst_15 = arith.constant dense<0.000000e+00> : vector<8xf32>
    %35 = vector.multi_reduction <add>, %34, %cst_15 [1] : vector<8x32xf32> to vector<8xf32>
    %36 = vector.shape_cast %35 : vector<8xf32> to vector<8x1xf32>
    %cst_16 = arith.constant 3.200000e+01 : f32
    %37 = vector.broadcast %cst_16 : f32 to vector<8x1xf32>
    %38 = arith.divf %36, %37 : vector<8x1xf32>
    %39 = arith.mulf %33, %33 : vector<8x1xf32>
    %40 = arith.subf %38, %39 : vector<8x1xf32>
    %cst_17 = arith.constant 0.000000e+00 : f32
    %41 = vector.broadcast %cst_17 : f32 to vector<8x1xf32>
    %42 = arith.maximumf %40, %41 : vector<8x1xf32>
    %cst_18 = arith.constant 9.99999974E-6 : f32
    %43 = vector.broadcast %cst_18 : f32 to vector<8x1xf32>
    %44 = arith.addf %42, %43 : vector<8x1xf32>
    %45 = math.rsqrt %44 : vector<8x1xf32>
    %46 = vector.extract_strided_slice %3 {offsets = [0, 64], sizes = [8, 64], strides = [1, 1]} : vector<8x128xf32> to vector<8x64xf32>
    %47 = vector.broadcast %33 : vector<8x1xf32> to vector<8x64xf32>
    %48 = vector.broadcast %4 : vector<1x64xf32> to vector<8x64xf32>
    %49 = arith.mulf %47, %48 : vector<8x64xf32>
    %50 = arith.subf %46, %49 : vector<8x64xf32>
    %51 = vector.broadcast %45 : vector<8x1xf32> to vector<8x64xf32>
    %52 = arith.mulf %51, %50 : vector<8x64xf32>
    %53 = tpu.concatenate %28, %52 in 1 : vector<8x64xf32>, vector<8x64xf32> -> vector<8x128xf32>
    %c0_19 = arith.constant 0 : index
    %c0_20 = arith.constant 0 : index
    %54 = vector.load %arg4[%c0_19, %c0_20] : memref<1x128xf32, #tpu.memory_space<vmem>>, vector<1x128xf32>
    %55 = vector.broadcast %54 : vector<1x128xf32> to vector<8x128xf32>
    %56 = arith.addf %53, %55 : vector<8x128xf32>
    %c0_21 = arith.constant 0 : index
    %c0_22 = arith.constant 0 : index
    %57 = vector.load %arg5[%c0_21, %c0_22] : memref<8x128xf32, #tpu.memory_space<vmem>>, vector<8x128xf32>
    tpu.vector_store %arg5[%c0_21, %c0_22], %56 {strides = array<i32>} : memref<8x128xf32, #tpu.memory_space<vmem>>, vector<8x128xf32>,
    return
  }
  func.func @transform_0(%arg0: i32) -> (i32, i32) {
    %c0_i32 = arith.constant 0 : i32
    %c0_i32_0 = arith.constant 0 : i32
    return %arg0, %c0_i32 : i32, i32
  }
  func.func @transform_1(%arg0: i32) -> (i32, i32) {
    %c0_i32 = arith.constant 0 : i32
    %c0_i32_0 = arith.constant 0 : i32
    %c0_i32_1 = arith.constant 0 : i32
    return %c0_i32, %c0_i32_0 : i32, i32
  }
  func.func @transform_2(%arg0: i32) -> (i32, i32) {
    %c0_i32 = arith.constant 0 : i32
    %c0_i32_0 = arith.constant 0 : i32
    %c0_i32_1 = arith.constant 0 : i32
    return %c0_i32, %c0_i32_0 : i32, i32
  }
  func.func @transform_3(%arg0: i32) -> (i32, i32) {
    %c0_i32 = arith.constant 0 : i32
    %c0_i32_0 = arith.constant 0 : i32
    %c0_i32_1 = arith.constant 0 : i32
    return %c0_i32, %c0_i32_0 : i32, i32
  }
  func.func @transform_4(%arg0: i32) -> (i32, i32) {
    %c0_i32 = arith.constant 0 : i32
    %c0_i32_0 = arith.constant 0 : i32
    return %arg0, %c0_i32 : i32, i32
  }
}

</mosaic_0001>

<llo_original>
// kernel: tpu_custom_call.1
$region0: #{tpu_custom_call.1}
  #allocation0 [shape = 'u32[]', space=smem, size = 0x4, offset = 0x4, fixed_abs, tag = 'smem constant byte address 0x4 - core index']
  #allocation1 [shape = 'u32[72,128]{1,0:T(1,128)}', space=vmem, size = 0x9000, scoped, tag = 'internal scratch']
  %s0 = inlined_call_operand.hbm [shape: f32[8,64], index: 0, kind: input, shape index: {}]
  %s1 = inlined_call_operand.hbm [shape: f32[64,128], index: 1, kind: input, shape index: {}]
  %s2 = inlined_call_operand.vmem [shape: f32[1,64], index: 2, kind: input, shape index: {}]
  %s3 = inlined_call_operand.vmem [shape: f32[1,128], index: 3, kind: input, shape index: {}]
  %s4 = inlined_call_operand.hbm [shape: f32[8,128], index: 4, kind: output, shape index: {}]
  %s5 = sld [smem:[#allocation0]]
  $region34: #{tpu_custom_call.1} parent=0
    _
  %s7 = ssub.s32 1, %s5
  %s8 = scalar_select 0, %s7, %s5
  $region1: #{tpu_custom_call.1} parent=0
    #allocation2 [shape = 'u8[4096]{0}', space=vmem, size = 0x1000, scoped, tag = 'input window, operand 0, single buffered']
    #allocation3 [shape = 's32[1]{0}', space=sflag, size = 0x4, scoped, tag = 'scoped memory for tpu_custom_call.1']
    #allocation4 [shape = 's32[1]{0}', space=sflag, size = 0x4, scoped, tag = 'scoped memory for tpu_custom_call.1']
    #allocation5 [shape = 'u8[32768]{0}', space=vmem, size = 0x8000, scoped, tag = 'input window, operand 1, single buffered']
    #allocation6 [shape = 's32[1]{0}', space=sflag, size = 0x4, scoped, tag = 'scoped memory for tpu_custom_call.1']
    #allocation7 [shape = 'u8[4096]{0}', space=vmem, size = 0x1000, scoped, tag = 'output window, operand 0, single buffered']
    %9 = vsyncpa [#allocation3], 0
    %10 = vsyncpa [#allocation6], 0
    %11 = vsyncpa [#allocation4], 0
    // Predicated region
    $region2: #{tpu_custom_call.1} parent=1 // pred_check
      _
    $region3: #{tpu_custom_call.1} parent=1 // pred_check_branch
      %13 = sbr.rel (0) target = $region5
    $region4: #{tpu_custom_call.1} parent=1 // pred_region
      %15 = vsyncadd [#allocation3], 0
      %s17 = sshll.u32 %s0, 4
      %s18 = int_to_ptr.hbm [resolvable:$true] %s17
      %s19 = sshll.u32 [#allocation2], 4
      %s20 = int_to_ptr.vmem [resolvable:$true] %s19
      %22 = dma.hbm_to_vmem [thread:$0]  %s18, 128, %s20, [#allocation3]
    $region5: #{tpu_custom_call.1} parent=1 // pred_fallthru
      _
    // Predicated region
    $region6: #{tpu_custom_call.1} parent=1 // pred_check
      _
    $region7: #{tpu_custom_call.1} parent=1 // pred_check_branch
      %24 = sbr.rel (0) target = $region9
    $region8: #{tpu_custom_call.1} parent=1 // pred_region
      %26 = vsyncadd [#allocation6], 0
      %s27 = sshll.u32 %s1, 4
      %s28 = int_to_ptr.hbm [resolvable:$true] %s27
      %s29 = sshll.u32 [#allocation5], 4
      %s30 = int_to_ptr.vmem [resolvable:$true] %s29
      %35 = dma.hbm_to_vmem [thread:$0]  %s28, 1024, %s30, [#allocation6], 128, 128, 8
    $region9: #{tpu_custom_call.1} parent=1 // pred_fallthru
      _
    // Predicated region
    $region10: #{tpu_custom_call.1} parent=1 // pred_check
      _
    $region11: #{tpu_custom_call.1} parent=1 // pred_check_branch
      %37 = sbr.rel (0) target = $region13
    $region12: #{tpu_custom_call.1} parent=1 // pred_region
      _
    $region13: #{tpu_custom_call.1} parent=1 // pred_fallthru
      _
    // Predicated region
    $region14: #{tpu_custom_call.1} parent=1 // pred_check
      _
    $region15: #{tpu_custom_call.1} parent=1 // pred_check_branch
      %39 = sbr.rel (0) target = $region17
    $region16: #{tpu_custom_call.1} parent=1 // pred_region
      _
    $region17: #{tpu_custom_call.1} parent=1 // pred_fallthru
      _
    // Predicated region
    $region18: #{tpu_custom_call.1} parent=1 // pred_check
      _
    $region19: #{tpu_custom_call.1} parent=1 // pred_check_branch
      %41 = sbr.rel (0) target = $region21
    $region20: #{tpu_custom_call.1} parent=1 // pred_region
      %43 = dma.done [#allocation3], 128
    $region21: #{tpu_custom_call.1} parent=1 // pred_fallthru
      _
    // Predicated region
    $region22: #{tpu_custom_call.1} parent=1 // pred_check
      _
    $region23: #{tpu_custom_call.1} parent=1 // pred_check_branch
      %45 = sbr.rel (0) target = $region25
    $region24: #{tpu_custom_call.1} parent=1 // pred_region
      %47 = dma.done [#allocation6], 1024
    $region25: #{tpu_custom_call.1} parent=1 // pred_fallthru
      _
    %v48 = vld [vmem:[#allocation2] sm:$0xff]
    %v49 = vld [vmem:[#allocation5] sm:$0xff]
    %v50 = vld [vmem:[#allocation5 + $0x8] sm:$0xff]
    %v51 = vld [vmem:[#allocation5 + $0x10] sm:$0xff]
    %v52 = vld [vmem:[#allocation5 + $0x18] sm:$0xff]
    %v53 = vld [vmem:[#allocation5 + $0x20] sm:$0xff]
    %v54 = vld [vmem:[#allocation5 + $0x28] sm:$0xff]
    %v55 = vld [vmem:[#allocation5 + $0x30] sm:$0xff]
    %v56 = vld [vmem:[#allocation5 + $0x38] sm:$0xff]
    %vm57 = vcmask 523264
    %v59 = vsel %vm57, %v48, 0
    %61 = vmatpush.msra.mxu0 0.0
    %62 = vmatpush.msra.mxu0 0.0
    %63 = vmatpush.msra.mxu0 0.0
    %64 = vmatpush.msra.mxu0 0.0
    %65 = vmatpush.msra.mxu0 0.0
    %66 = vmatpush.msra.mxu0 0.0
    %67 = vmatpush.msra.mxu0 0.0
    %68 = vmatpush.msra.mxu0 0.0
    %69 = vmatpush.msra.mxu0 %v56
    %70 = vmatpush.msra.mxu0 %v55
    %71 = vmatpush.msra.mxu0 %v54
    %72 = vmatpush.msra.mxu0 %v53
    %73 = vmatpush.msra.mxu0 %v52
    %74 = vmatpush.msra.mxu0 %v51
    %75 = vmatpush.msra.mxu0 %v50
    %76 = vmatpush.msra.mxu0 %v49
    %77 = vmatmul.f32.gmra.mxu0 %v59
    %v78 = vpop.f32.mrf.mxu0
    %v79 = vadd.f32 0.0, %v78
    %80 = vdwg.mxu0
    %v81 = vld [vmem:[%s2] sm:$0x1]
    %vm82 = vcmask 261120
    %v83 = vsel %vm82, %v48, 0.0
    %84 = vadd.xlane.f32.xlu0 %v83
    %v85 = vpop.xlane.xlu0 %84
    %v86 = vrcp.pop 32.0
    %v87 = vmul.f32 32.0, %v86
    %v88 = vsub.f32 1.0, %v87
    %v89 = vmul.f32 %v86, %v88
    %v90 = vadd.f32 %v86, %v89
    %vm91 = vweird.f32 %v86
    %v92 = vsel %vm91, %v86, %v90
    %v93 = vmul.f32 %v85, %v92
    %v94 = vmul.f32 %v48, %v48
    %v95 = vsel %vm82, %v94, 0.0
    %96 = vadd.xlane.f32.xlu0 %v95
    %v97 = vpop.xlane.xlu0 %96
    %v98 = vmul.f32 %v97, %v92
    %v99 = vmul.f32 %v93, %v93
    %v100 = vsub.f32 %v98, %v99
    %v101 = vmax.f32 %v100, 0.0
    %v102 = vadd.f32 %v101, 1e-05
    %v103 = vrsqrt.pop %v102
    %v104 = vmul.f32 %v103, %v102
    %v105 = vmul.f32 %v104, %v103
    %v106 = vmul.f32 0.5, %v105
    %v107 = vsub.f32 1.5, %v106
    %v108 = vmul.f32 %v103, %v107
    %vm109 = vweird.f32 %v102
    %vm110 = vweird.f32 %v103
    %vm111 = vmor %vm109, %vm110
    %v112 = vsel %vm111, %v103, %v108
    %v114 = vperm.slane %v81, 0
    %v116 = vmul.f32 %v93, %v114
    %v117 = vsub.f32 %v79, %v116
    %v118 = vmul.f32 %v112, %v117
    %119 = vrot.lane.b32.xlu0 %v48, 96
    %v120 = vpop.permute.xlu0 %119
    %v122 = vsel %vm82, %v120, 0.0
    %123 = vadd.xlane.f32.xlu0 %v122
    %v124 = vpop.xlane.xlu0 %123
    %v125 = vmul.f32 %v124, %v92
    %127 = vrot.lane.b32.xlu0 %v94, 96
    %v128 = vpop.permute.xlu0 %127
    %v130 = vsel %vm82, %v128, 0.0
    %131 = vadd.xlane.f32.xlu0 %v130
    %v132 = vpop.xlane.xlu0 %131
    %v133 = vmul.f32 %v132, %v92
    %v134 = vmul.f32 %v125, %v125
    %v135 = vsub.f32 %v133, %v134
    %v136 = vmax.f32 %v135, 0.0
    %v137 = vadd.f32 %v136, 1e-05
    %v138 = vrsqrt.pop %v137
    %v139 = vmul.f32 %v138, %v137
    %v140 = vmul.f32 %v139, %v138
    %v141 = vmul.f32 0.5, %v140
    %v142 = vsub.f32 1.5, %v141
    %v143 = vmul.f32 %v138, %v142
    %vm144 = vweird.f32 %v137
    %vm145 = vweird.f32 %v138
    %vm146 = vmor %vm144, %vm145
    %v147 = vsel %vm146, %v138, %v143
    %v148 = vmul.f32 %v125, %v114
    %150 = vrot.lane.b32.xlu0 %v148, 64
    %v151 = vpop.permute.xlu0 %150
    %v153 = vsub.f32 %v79, %v151
    %v154 = vmul.f32 %v147, %v153
    %v155 = vsel %vm57, %v118, %v154
    %v156 = vld [vmem:[%s3] sm:$0x1]
    %v158 = vperm.slane %v156, 0
    %v160 = vadd.f32 %v155, %v158
    %161 = vst [vmem:[#allocation7] sm:$0xff] %v160
    // Predicated region
    $region26: #{tpu_custom_call.1} parent=1 // pred_check
      _
    $region27: #{tpu_custom_call.1} parent=1 // pred_check_branch
      %163 = sbr.rel (0) target = $region29
    $region28: #{tpu_custom_call.1} parent=1 // pred_region
      %165 = vsyncadd [#allocation4], 0
      %s167 = sshll.u32 [#allocation7], 4
      %s168 = int_to_ptr.vmem [resolvable:$true] %s167
      %s169 = sshll.u32 %s4, 4
      %s170 = int_to_ptr.hbm [resolvable:$true] %s169
      %172 = dma.vmem_to_hbm [thread:$0]  %s168, 128, %s170, [#allocation4]
    $region29: #{tpu_custom_call.1} parent=1 // pred_fallthru
      _
    // Predicated region
    $region30: #{tpu_custom_call.1} parent=1 // pred_check
      _
    $region31: #{tpu_custom_call.1} parent=1 // pred_check_branch
      %174 = sbr.rel (0) target = $region33
    $region32: #{tpu_custom_call.1} parent=1 // pred_region
      %176 = dma.done [#allocation4], 128
    $region33: #{tpu_custom_call.1} parent=1 // pred_fallthru
      _
    %177 = vsyncpa [#allocation3], 1
    %178 = vsyncpa [#allocation6], 1
    %179 = vsyncpa [#allocation4], 1

</llo_original>
